<compile_context>
chip_gen: v5e
topology: v5e:2x2
jax: 0.10.0
libtpu: 0.0.40
codegen_flags: <defaults>
</compile_context>

<pallas_src>
import math

import jax
import jax.numpy as jnp
from jax.experimental import pallas as pl
from jax.experimental.pallas import tpu as pltpu


# ----------------------------- kernels --------------------------------------


def support_kernel(x_ref, w_ref, s_ref):
    """support_tile = x_tile @ W  (bf16 MXU inputs, f32 accumulate, bf16 store)."""
    s_ref[...] = jnp.dot(
        x_ref[...].astype(jnp.bfloat16),
        w_ref[...].astype(jnp.bfloat16),
        preferred_element_type=jnp.float32,
    ).astype(s_ref.dtype)


def aggregate_kernel(adj_ref, s_ref, b_ref, out_ref):
    """out_tile = adj_tile @ support + bias.

    adj streams in as f32 and is cast to bf16 in-kernel (the VPU cast is free
    next to the HBM-bound adj stream); the MXU accumulates in f32 and the bias
    is added in f32 before the final store.
    """
    acc = jnp.dot(
        adj_ref[...].astype(jnp.bfloat16),
        s_ref[...],
        preferred_element_type=jnp.float32,
    )
    out_ref[...] = (acc + b_ref[...]).astype(out_ref.dtype)


# ----------------------------- tiling / budget -------------------------------

_TILE_CANDIDATES = (1024, 512, 256, 128, 64, 32, 16, 8)
_MIN_GRID_STEPS = 4  # keep the pipeline busy and both v7x TensorCores fed


def _tpu_vmem_limit_bytes():
    """~75% of this generation's physical VMEM (per TensorCore)."""
    try:
        cap = int(pltpu.get_tpu_info().vmem_capacity_bytes)
    except Exception:
        cap = 64 << 20  # conservative default: v7x per-TC VMEM
    return (cap * 3) // 4


def _stage_need_bytes(t, n_pad, in_f, out_f, *, adj_buffers, resident_buffers):
    """Upper bound on VMEM residency of either stage for row tile `t`."""
    stage2 = (
        resident_buffers * n_pad * out_f * 2    # resident bf16 support
        + adj_buffers * t * n_pad * 4           # streamed f32 adj row tile
        + 2 * t * out_f * 4                     # double-buffered f32 out tile
        + resident_buffers * out_f * 4          # bias row (f32)
    )
    stage1 = (
        2 * t * in_f * 4                        # streamed f32 x row tile
        + resident_buffers * in_f * out_f * 4   # resident f32 weight
        + 2 * t * out_f * 2                     # bf16 support out tile
    )
    return max(stage1, stage2)


def _pick_tile_rows(n, in_f, out_f, budget_bytes, *, resident_buffers):
    """Largest row tile (and padded N) whose resident set fits the VMEM budget."""
    for min_steps in (_MIN_GRID_STEPS, 1):
        for t in _TILE_CANDIDATES:
            n_pad = pl.cdiv(n, t) * t
            steps = n_pad // t
            need = _stage_need_bytes(
                t, n_pad, in_f, out_f,
                adj_buffers=2, resident_buffers=resident_buffers)
            if need <= budget_bytes and steps >= min_steps:
                return t, n_pad
    # TODO(synk): very large graphs need a K-tiled stage 2 (accumulate over
    # column blocks of adj with pl.when init/finalize) instead of a fully
    # resident support block.
    raise NotImplementedError(
        "graph too large for the resident-support scheme on this TPU generation")


# ----------------------------- wrapper ---------------------------------------


def graph_convolution(x, adj, weight, bias):
    """output = adj @ (x @ weight) + bias, computed with Pallas TPU kernels."""
    n, in_f = x.shape
    out_f = weight.shape[1]
    assert adj.shape == (n, n)
    assert weight.shape[0] == in_f and bias.shape == (out_f,)

    vmem_limit = _tpu_vmem_limit_bytes()
    # Leave headroom for compiler internal scratch / semaphores.
    budget = max(vmem_limit - (6 << 20), vmem_limit // 2)

    def run(custom_buffering):
        resident_buffers = 1 if custom_buffering else 2
        tile_rows, n_pad = _pick_tile_rows(
            n, in_f, out_f, budget, resident_buffers=resident_buffers)

        # Extra pipeline depth on the streamed adj tile when steps are short.
        adj_buffers = 2
        if custom_buffering and tile_rows <= 64:
            need3 = _stage_need_bytes(
                tile_rows, n_pad, in_f, out_f,
                adj_buffers=3, resident_buffers=resident_buffers)
            if need3 <= budget:
                adj_buffers = 3

        def spec(shape, index_map, buffers=None):
            if custom_buffering and buffers is not None:
                return pl.BlockSpec(shape, index_map,
                                    pipeline_mode=pl.Buffered(buffers))
            return pl.BlockSpec(shape, index_map)

        # Pad N (zero rows of x, zero rows/cols of adj) so every row tile is
        # full-sized; padded output rows are sliced off at the end.  Zero adj
        # columns hit zero support rows, so real rows are unaffected.
        if n_pad != n:
            x_in = jnp.pad(x, ((0, n_pad - n), (0, 0)))
            adj_in = jnp.pad(adj, ((0, n_pad - n), (0, n_pad - n)))
        else:
            x_in, adj_in = x, adj

        grid = (n_pad // tile_rows,)
        cparams = pltpu.CompilerParams(
            dimension_semantics=("parallel",),
            vmem_limit_bytes=int(vmem_limit),
        )

        # ---- stage 1: support = x @ W  (tiny; bf16 MXU, f32 accumulate) ----
        support = pl.pallas_call(
            support_kernel,
            out_shape=jax.ShapeDtypeStruct((n_pad, out_f), jnp.bfloat16),
            grid_spec=pltpu.PrefetchScalarGridSpec(
                num_scalar_prefetch=0,
                grid=grid,
                in_specs=[
                    spec((tile_rows, in_f), lambda i: (i, 0)),            # streamed x
                    spec((in_f, out_f), lambda i: (0, 0), buffers=1),     # resident W
                ],
                out_specs=pl.BlockSpec((tile_rows, out_f), lambda i: (i, 0)),
            ),
            compiler_params=cparams,
        )(x_in, weight)

        # ---- stage 2: out = adj @ support + bias  (dominant, HBM-bound) ----
        # TODO(synk): if the real adjacency is sparse (torch.spmm use case),
        # switch to block-sparse streaming via scalar-prefetched column-block
        # lists to skip zero blocks on the dominant stream.
        bias2d = bias.reshape(1, out_f).astype(jnp.float32)
        out = pl.pallas_call(
            aggregate_kernel,
            out_shape=jax.ShapeDtypeStruct((n_pad, out_f), x.dtype),
            grid_spec=pltpu.PrefetchScalarGridSpec(
                num_scalar_prefetch=0,
                grid=grid,
                in_specs=[
                    # streamed f32 adj row tile (cast to bf16 inside the kernel)
                    spec((tile_rows, n_pad), lambda i: (i, 0),
                         buffers=adj_buffers if adj_buffers != 2 else None),
                    # resident bf16 support, same block every step (no re-DMA)
                    spec((n_pad, out_f), lambda i: (0, 0), buffers=1),
                    # resident f32 bias row
                    spec((1, out_f), lambda i: (0, 0), buffers=1),
                ],
                out_specs=pl.BlockSpec((tile_rows, out_f), lambda i: (i, 0)),
            ),
            compiler_params=cparams,
        )(adj_in, support, bias2d)

        return out[:n] if n_pad != n else out

    try:
        return run(custom_buffering=True)
    except NotImplementedError:
        raise
    except Exception:
        # Pallas builds that reject `pipeline_mode=` on pallas_call BlockSpecs:
        # fall back to default double-buffering (identical semantics).
        return run(custom_buffering=False)


def init_params(key, in_features, out_features):
    """Deterministic xavier_normal_(gain=0.02) weight, zero bias (init='xavier')."""
    std = 0.02 * math.sqrt(2.0 / (in_features + out_features))
    weight = std * jax.random.normal(key, (in_features, out_features), jnp.float32)
    bias = jnp.zeros((out_features,), jnp.float32)
    return weight, bias


def _reference_bf16(x, adj, weight, bias):
    """Pure-JAX reference with the same bf16 rounding as the kernels."""
    support = jnp.dot(
        x.astype(jnp.bfloat16), weight.astype(jnp.bfloat16),
        preferred_element_type=jnp.float32,
    ).astype(jnp.bfloat16)
    out = jnp.dot(adj.astype(jnp.bfloat16), support,
                  preferred_element_type=jnp.float32)
    return out + bias


if __name__ == "__main__":
    key = jax.random.PRNGKey(0)
    k_x, k_adj, k_w = jax.random.split(key, 3)

    IN_FEATURES, OUT_FEATURES = 64, 128

    def make_inputs(n, kx, kadj):
        x = jax.random.normal(kx, (n, IN_FEATURES), jnp.float32)
        # dense adjacency (torch.spmm with dense math semantics), row-normalized
        adj_raw = jax.random.uniform(kadj, (n, n), jnp.float32)
        adj = (adj_raw > 0.9).astype(jnp.float32)
        adj = adj / jnp.maximum(adj.sum(axis=1, keepdims=True), 1.0)
        return x, adj

    weight, bias = init_params(k_w, IN_FEATURES, OUT_FEATURES)

    # Case 1: N divisible by the chosen row tile (no padding path).
    x, adj = make_inputs(256, k_x, k_adj)
    out = jax.block_until_ready(graph_convolution(x, adj, weight, bias))
    assert out.shape == (256, OUT_FEATURES)
    assert jnp.allclose(out, _reference_bf16(x, adj, weight, bias),
                        atol=1e-2, rtol=1e-2), "mismatch vs bf16 reference (N=256)"
    assert jnp.allclose(out, adj @ (x @ weight) + bias,
                        atol=5e-2, rtol=5e-2), "mismatch vs f32 reference (N=256)"

    # Case 2: N not divisible by the row tile (exercises the padding path).
    x2, adj2 = make_inputs(200, k_adj, k_x)
    out2 = jax.block_until_ready(graph_convolution(x2, adj2, weight, bias))
    assert out2.shape == (200, OUT_FEATURES)
    assert jnp.allclose(out2, _reference_bf16(x2, adj2, weight, bias),
                        atol=1e-2, rtol=1e-2), "mismatch vs bf16 reference (N=200)"
    assert jnp.allclose(out2, adj2 @ (x2 @ weight) + bias,
                        atol=5e-2, rtol=5e-2), "mismatch vs f32 reference (N=200)"

    print("KERNEL_OK")
</pallas_src>

<mosaic_0001>
module attributes {stable_mosaic.version = 11 : i64} {
  func.func @support_kernel(%arg0: i32, %arg1: memref<64x64xf32, #tpu.memory_space<vmem>>, %arg2: memref<64x128xf32, #tpu.memory_space<vmem>>, %arg3: memref<64x128xbf16, #tpu.memory_space<vmem>>) attributes {dimension_semantics = [#tpu.dimension_semantics<parallel>], iteration_bounds = array<i64: 4>, scalar_prefetch = 0 : i64, scratch_operands = 0 : i64, tpu.core_type = #tpu.core_type<tc>, window_params = [{transform_indices = @transform_0, window_bounds = array<i64: 64, 64>}, {pipeline_mode = #tpu.pipeline_mode<synchronous>, transform_indices = @transform_1, window_bounds = array<i64: 64, 128>}, {transform_indices = @transform_2, window_bounds = array<i64: 64, 128>}]} {
    %c0 = arith.constant 0 : index
    %c0_0 = arith.constant 0 : index
    %0 = vector.load %arg1[%c0, %c0_0] : memref<64x64xf32, #tpu.memory_space<vmem>>, vector<64x64xf32>
    %1 = arith.truncf %0 : vector<64x64xf32> to vector<64x64xbf16>
    %c0_1 = arith.constant 0 : index
    %c0_2 = arith.constant 0 : index
    %2 = vector.load %arg2[%c0_1, %c0_2] : memref<64x128xf32, #tpu.memory_space<vmem>>, vector<64x128xf32>
    %3 = arith.truncf %2 : vector<64x128xf32> to vector<64x128xbf16>
    %cst = arith.constant dense<0.000000e+00> : vector<64x128xf32>
    %4 = tpu.matmul %1, %3, %cst {dimension_numbers = #tpu.dot_dimension_numbers<[1], [0], [0], [1], [0, 0, 1, 1], [], []>} : vector<64x64xbf16>, vector<64x128xbf16>, vector<64x128xf32> -> vector<64x128xf32>
    %5 = arith.truncf %4 : vector<64x128xf32> to vector<64x128xbf16>
    %c0_3 = arith.constant 0 : index
    %c0_4 = arith.constant 0 : index
    %6 = vector.load %arg3[%c0_3, %c0_4] : memref<64x128xbf16, #tpu.memory_space<vmem>>, vector<64x128xbf16>
    tpu.vector_store %arg3[%c0_3, %c0_4], %5 {strides = array<i32>} : memref<64x128xbf16, #tpu.memory_space<vmem>>, vector<64x128xbf16>,
    return
  }
  func.func @transform_0(%arg0: i32) -> (i32, i32) {
    %c0_i32 = arith.constant 0 : i32
    %c0_i32_0 = arith.constant 0 : i32
    return %arg0, %c0_i32 : i32, i32
  }
  func.func @transform_1(%arg0: i32) -> (i32, i32) {
    %c0_i32 = arith.constant 0 : i32
    %c0_i32_0 = arith.constant 0 : i32
    %c0_i32_1 = arith.constant 0 : i32
    return %c0_i32, %c0_i32_0 : i32, i32
  }
  func.func @transform_2(%arg0: i32) -> (i32, i32) {
    %c0_i32 = arith.constant 0 : i32
    %c0_i32_0 = arith.constant 0 : i32
    return %arg0, %c0_i32 : i32, i32
  }
}

module attributes {stable_mosaic.version = 11 : i64} {
  func.func @support_kernel(%arg0: i32, %arg1: memref<64x64xf32, #tpu.memory_space<vmem>>, %arg2: memref<64x128xf32, #tpu.memory_space<vmem>>, %arg3: memref<64x128xbf16, #tpu.memory_space<vmem>>) attributes {dimension_semantics = [#tpu.dimension_semantics<parallel>], iteration_bounds = array<i64: 4>, scalar_prefetch = 0 : i64, scratch_operands = 0 : i64, tpu.core_type = #tpu.core_type<tc>, window_params = [{transform_indices = @transform_0, window_bounds = array<i64: 64, 64>}, {pipeline_mode = #tpu.pipeline_mode<synchronous>, transform_indices = @transform_1, window_bounds = array<i64: 64, 128>}, {transform_indices = @transform_2, window_bounds = array<i64: 64, 128>}]} {
    %c0 = arith.constant 0 : index
    %c0_0 = arith.constant 0 : index
    %0 = vector.load %arg1[%c0, %c0_0] : memref<64x64xf32, #tpu.memory_space<vmem>>, vector<64x64xf32>
    %1 = arith.truncf %0 : vector<64x64xf32> to vector<64x64xbf16>
    %c0_1 = arith.constant 0 : index
    %c0_2 = arith.constant 0 : index
    %2 = vector.load %arg2[%c0_1, %c0_2] : memref<64x128xf32, #tpu.memory_space<vmem>>, vector<64x128xf32>
    %3 = arith.truncf %2 : vector<64x128xf32> to vector<64x128xbf16>
    %cst = arith.constant dense<0.000000e+00> : vector<64x128xf32>
    %4 = tpu.matmul %1, %3, %cst {dimension_numbers = #tpu.dot_dimension_numbers<[1], [0], [0], [1], [0, 0, 1, 1], [], []>} : vector<64x64xbf16>, vector<64x128xbf16>, vector<64x128xf32> -> vector<64x128xf32>
    %5 = arith.truncf %4 : vector<64x128xf32> to vector<64x128xbf16>
    %c0_3 = arith.constant 0 : index
    %c0_4 = arith.constant 0 : index
    %6 = vector.load %arg3[%c0_3, %c0_4] : memref<64x128xbf16, #tpu.memory_space<vmem>>, vector<64x128xbf16>
    tpu.vector_store %arg3[%c0_3, %c0_4], %5 {strides = array<i32>} : memref<64x128xbf16, #tpu.memory_space<vmem>>, vector<64x128xbf16>,
    return
  }
  func.func @transform_0(%arg0: i32) -> (i32, i32) {
    %c0_i32 = arith.constant 0 : i32
    %c0_i32_0 = arith.constant 0 : i32
    return %arg0, %c0_i32 : i32, i32
  }
  func.func @transform_1(%arg0: i32) -> (i32, i32) {
    %c0_i32 = arith.constant 0 : i32
    %c0_i32_0 = arith.constant 0 : i32
    %c0_i32_1 = arith.constant 0 : i32
    return %c0_i32, %c0_i32_0 : i32, i32
  }
  func.func @transform_2(%arg0: i32) -> (i32, i32) {
    %c0_i32 = arith.constant 0 : i32
    %c0_i32_0 = arith.constant 0 : i32
    return %arg0, %c0_i32 : i32, i32
  }
}

</mosaic_0001>

<llo_original>
// kernel: tpu_custom_call.1
$region0: #{tpu_custom_call.1}
  #allocation0 [shape = 'u32[]', space=smem, size = 0x4, offset = 0x4, fixed_abs, tag = 'smem constant byte address 0x4 - core index']
  #allocation1 [shape = 'u32[72,128]{1,0:T(1,128)}', space=vmem, size = 0x9000, scoped, tag = 'internal scratch']
  %s0 = inlined_call_operand.vmem [shape: f32[256,64], index: 0, kind: input, shape index: {}]
  %s1 = inlined_call_operand.vmem [shape: f32[64,128], index: 1, kind: input, shape index: {}]
  %s2 = inlined_call_operand.hbm [shape: bf16[256,128], index: 2, kind: output, shape index: {}]
  %s3 = sld [smem:[#allocation0]]
  $region41: #{tpu_custom_call.1} parent=0
    _
  %s5 = ssub.s32 1, %s3
  %s6 = scalar_select 0, %s5, %s3
  $region1: #{tpu_custom_call.1} parent=0
    #allocation2 [shape = 'u8[32768]{0}', space=vmem, size = 0x8000, scoped, tag = 'output window, operand 0']
    #allocation3 [shape = 's32[2]{0}', space=sflag, size = 0x8, scoped, tag = 'scoped memory for tpu_custom_call.1']
    %7 = vsyncpa [#allocation3], 0
    %s8 = scalar_lea.sflag [#allocation3], 1
    %9 = vsyncpa %s8, 0
    loop: start=0, step=1, limit=6
    $region2: #{tpu_custom_call.1} parent=1 // loop_pre_header
      _
    $region3: #{tpu_custom_call.1} parent=1 // loop_header
      %s11 = sphi 0, %s15
      %p12 = scmp.ge.s32.totalorder %s11, 6
      %s21 = sphi 0, %s23
      %s24 = sphi 0, %s21
      %s25 = sphi 0, %s24
      %s41 = sphi 0, %s25
      %s45 = sphi 0, %s45
      %s47 = sphi 0, %s45
      %s48 = sphi 0, %s47
      %s62 = sphi 0, %s48
      %s68 = sphi 0, %s70
      %s71 = sphi 0, %s68
      %s72 = sphi 0, %s71
      %s88 = sphi 0, %s72
    $region4: #{tpu_custom_call.1} parent=1 // loop_header_branch
      %14 = sbr.rel (%p12) target = $region8
    $region5: #{tpu_custom_call.1} parent=1 // loop_body
      %s16 = ssub.s32 %s11, 1
      %s17 = ssub.s32 %s11, 2
      %s18 = sadd.s32 %s11, 1
      %s19 = ssub.s32 %s11, %s18
      %p20 = scmp.eq.s32.totalorder %s19, 0
      %s22 = sadd.s32 %s21, 1
      %s23 = scalar_select %p20, %s21, %s22
      %p26 = pneg %p20
      %p27 = scmp.eq.s32.totalorder %s11, 3
      %p28 = por %p26, %p27
      %p29 = scmp.ne.s32.totalorder %s21, %s24
      %p30 = scmp.eq.s32.totalorder %s11, 0
      %p31 = por %p29, %p30
      %p32 = scmp.ne.s32.totalorder %s21, %s24
      %p33 = scmp.eq.s32.totalorder %s16, 3
      %p34 = por %p32, %p33
      %p35 = scmp.ne.s32.totalorder %s24, %s25
      %p36 = scmp.eq.s32.totalorder %s16, 0
      %p37 = por %p35, %p36
      %p38 = scmp.ne.s32.totalorder %s24, %s25
      %p39 = scmp.eq.s32.totalorder %s17, 3
      %p40 = por %p38, %p39
      %p42 = scmp.ne.s32.totalorder %s25, %s41
      %p43 = scmp.eq.s32.totalorder %s17, 0
      %p44 = por %p42, %p43
      %s46 = sadd.s32 %s45, 1
      %p49 = scmp.eq.s32.totalorder %s11, 3
      %p50 = scmp.ne.s32.totalorder %s45, %s47
      %p51 = scmp.eq.s32.totalorder %s11, 0
      %p52 = por %p50, %p51
      %p53 = scmp.ne.s32.totalorder %s45, %s47
      %p54 = scmp.eq.s32.totalorder %s16, 3
      %p55 = por %p53, %p54
      %p56 = scmp.ne.s32.totalorder %s47, %s48
      %p57 = scmp.eq.s32.totalorder %s16, 0
      %p58 = por %p56, %p57
      %p59 = scmp.ne.s32.totalorder %s47, %s48
      %p60 = scmp.eq.s32.totalorder %s17, 3
      %p61 = por %p59, %p60
      %p63 = scmp.ne.s32.totalorder %s48, %s62
      %p64 = scmp.eq.s32.totalorder %s17, 0
      %p65 = por %p63, %p64
      %s66 = ssub.s32 %s11, %s18
      %p67 = scmp.eq.s32.totalorder %s66, 0
      %s69 = sadd.s32 %s68, 1
      %s70 = scalar_select %p67, %s68, %s69
      %p73 = pneg %p67
      %p74 = scmp.eq.s32.totalorder %s11, 3
      %p75 = por %p73, %p74
      %p76 = scmp.ne.s32.totalorder %s68, %s71
      %p77 = scmp.eq.s32.totalorder %s11, 0
      %p78 = por %p76, %p77
      %p79 = scmp.ne.s32.totalorder %s68, %s71
      %p80 = scmp.eq.s32.totalorder %s16, 3
      %p81 = por %p79, %p80
      %p82 = scmp.ne.s32.totalorder %s71, %s72
      %p83 = scmp.eq.s32.totalorder %s16, 0
      %p84 = por %p82, %p83
      %p85 = scmp.ne.s32.totalorder %s71, %s72
      %p86 = scmp.eq.s32.totalorder %s17, 3
      %p87 = por %p85, %p86
      %p89 = scmp.ne.s32.totalorder %s72, %s88
      %p90 = scmp.eq.s32.totalorder %s17, 0
      %p91 = por %p89, %p90
      %p92 = scmp.le.s32.totalorder 1, %s11
      %p93 = scmp.lt.s32.totalorder %s11, 5
      %p94 = pnand %p92, %p93
      %p95 = pneg %p94
      // Predicated region
      $region9: #{tpu_custom_call.1} parent=5 // pred_check
        _
      $region10: #{tpu_custom_call.1} parent=5 // pred_check_branch
        %97 = sbr.rel (%p94) target = $region12
      $region11: #{tpu_custom_call.1} parent=5 // pred_region
        %s98 = ssub.s32 %s11, 1
        // Predicated region
        $region13: #{tpu_custom_call.1} parent=11 // pred_check
          %p99 = pneg %p58
        $region14: #{tpu_custom_call.1} parent=11 // pred_check_branch
          %101 = sbr.rel (%p99) target = $region16
        $region15: #{tpu_custom_call.1} parent=11 // pred_region
          _
        $region16: #{tpu_custom_call.1} parent=11 // pred_fallthru
          _
      $region12: #{tpu_custom_call.1} parent=5 // pred_fallthru
        _
      %p102 = scmp.lt.s32.totalorder %s11, 4
      // Predicated region
      $region17: #{tpu_custom_call.1} parent=5 // pred_check
        %p103 = pneg %p102
      $region18: #{tpu_custom_call.1} parent=5 // pred_check_branch
        %105 = sbr.rel (%p103) target = $region20
      $region19: #{tpu_custom_call.1} parent=5 // pred_region
        // Predicated region
        $region21: #{tpu_custom_call.1} parent=19 // pred_check
          %p106 = pneg %p31
        $region22: #{tpu_custom_call.1} parent=19 // pred_check_branch
          %108 = sbr.rel (%p106) target = $region24
        $region23: #{tpu_custom_call.1} parent=19 // pred_region
          %s109 = smul.u32 8, %s11
          %p110 = scmp.lt.s32.totalorder %s109, 31
          %s111 = scalar_select %p110, %s109, 31
          %s112 = smul.addr %s111, 8
          %s113 = scalar_lea.vmem %s0, %s112
          %s114 = smul.u32 8, %s11
        $region24: #{tpu_custom_call.1} parent=19 // pred_fallthru
          _
      $region20: #{tpu_custom_call.1} parent=5 // pred_fallthru
        _
      %p115 = scmp.le.s32.totalorder 1, %s11
      %p116 = scmp.lt.s32.totalorder %s11, 5
      %p117 = pnand %p115, %p116
      %p118 = pneg %p117
      // Predicated region
      $region25: #{tpu_custom_call.1} parent=5 // pred_check
        _
      $region26: #{tpu_custom_call.1} parent=5 // pred_check_branch
        %120 = sbr.rel (%p117) target = $region28
      $region27: #{tpu_custom_call.1} parent=5 // pred_region
        %s121 = ssub.s32 %s11, 1
        %s122 = smul.u32 8, %s16
        %p123 = scmp.lt.s32.totalorder %s122, 31
        %s124 = scalar_select %p123, %s122, 31
        %s125 = smul.addr %s124, 8
        %s126 = scalar_lea.vmem %s0, %s125
        %p127 = pneg %p37
        %p128 = pneg %p34
        %p129 = pneg %p58
        %p130 = pneg %p55
        %p131 = pneg %p84
        %p132 = pneg %p81
        %s133 = sand.u32 %s71, 1
        %s134 = scalar_lea.sflag [#allocation3], %s133
        %s135 = sand.u32 %s71, 1
        %s136 = smul.addr %s135, 32
        %s137 = scalar_lea.vmem [#allocation2], %s136
        %s138 = smul.u32 8, %s16
        %p139 = scmp.lt.s32.totalorder %s138, 31
        %s140 = scalar_select %p139, %s138, 31
        %s141 = smul.addr %s140, 8
        %s142 = scalar_lea.vmem %s0, %s141
        %s143 = smul.u32 8, %s16
        %s144 = smul.u32 8, %s16
        %v146 = vld [vmem:[%s142] sm:$0xff]
        %v147 = vld [vmem:[%s142 + $0x8] sm:$0xff]
        %v148 = vld [vmem:[%s142 + $0x10] sm:$0xff]
        %v149 = vld [vmem:[%s142 + $0x18] sm:$0xff]
        %v150 = vld [vmem:[%s142 + $0x20] sm:$0xff]
        %v151 = vld [vmem:[%s142 + $0x28] sm:$0xff]
        %v152 = vld [vmem:[%s142 + $0x30] sm:$0xff]
        %v153 = vld [vmem:[%s142 + $0x38] sm:$0xff]
        %v154 = vpack.c.bf16 %v147, %v146
        %v155 = vpack.c.bf16 %v149, %v148
        %v156 = vpack.c.bf16 %v151, %v150
        %v157 = vpack.c.bf16 %v153, %v152
        %v158 = vld [vmem:[%s1] sm:$0xff]
        %v159 = vld [vmem:[%s1 + $0x8] sm:$0xff]
        %v160 = vld [vmem:[%s1 + $0x10] sm:$0xff]
        %v161 = vld [vmem:[%s1 + $0x18] sm:$0xff]
        %v162 = vld [vmem:[%s1 + $0x20] sm:$0xff]
        %v163 = vld [vmem:[%s1 + $0x28] sm:$0xff]
        %v164 = vld [vmem:[%s1 + $0x30] sm:$0xff]
        %v165 = vld [vmem:[%s1 + $0x38] sm:$0xff]
        %v166 = vpack.c.bf16 %v159, %v158
        %v167 = vpack.c.bf16 %v161, %v160
        %v168 = vpack.c.bf16 %v163, %v162
        %v169 = vpack.c.bf16 %v165, %v164
        %vm170 = vcmask 523264
        %v172 = vsel %vm170, %v154, 0
        %v175 = vsel %vm170, %v155, 0
        %v178 = vsel %vm170, %v156, 0
        %v181 = vsel %vm170, %v157, 0
        %183 = vmatpush.bf16.msra.mxu0 0
        %184 = vmatpush.bf16.msra.mxu0 0
        %185 = vmatpush.bf16.msra.mxu0 0
        %186 = vmatpush.bf16.msra.mxu0 0
        %187 = vmatpush.bf16.msra.mxu0 %v169
        %188 = vmatpush.bf16.msra.mxu0 %v168
        %189 = vmatpush.bf16.msra.mxu0 %v167
        %190 = vmatpush.bf16.msra.mxu0 %v166
        %191 = vmatmul.bf16.gmra.mxu0 %v172
        %v192 = vpop.f32.mrf.mxu0
        %v193 = vadd.f32 0.0, %v192
        %v194 = vpop.f32.mrf.mxu0
        %v195 = vadd.f32 0.0, %v194
        %196 = vmatmul.bf16.gmra.mxu0 %v175
        %v197 = vpop.f32.mrf.mxu0
        %v198 = vadd.f32 0.0, %v197
        %v199 = vpop.f32.mrf.mxu0
        %v200 = vadd.f32 0.0, %v199
        %201 = vmatmul.bf16.gmra.mxu0 %v178
        %v202 = vpop.f32.mrf.mxu0
        %v203 = vadd.f32 0.0, %v202
        %v204 = vpop.f32.mrf.mxu0
        %v205 = vadd.f32 0.0, %v204
        %206 = vmatmul.bf16.gmra.mxu0 %v181
        %v207 = vpop.f32.mrf.mxu0
        %v208 = vadd.f32 0.0, %v207
        %v209 = vpop.f32.mrf.mxu0
        %v210 = vadd.f32 0.0, %v209
        %211 = vdwg.mxu0
        %v212 = vpack.c.bf16 %v193, %v193
        %v213 = vpack.c.bf16 %v195, %v195
        %v214 = vpack.c.bf16 %v198, %v198
        %v215 = vpack.c.bf16 %v200, %v200
        %v216 = vpack.c.bf16 %v203, %v203
        %v217 = vpack.c.bf16 %v205, %v205
        %v218 = vpack.c.bf16 %v208, %v208
        %v219 = vpack.c.bf16 %v210, %v210
        %220 = vst [vmem:[%s137] sm:$0xf] %v212
        %221 = vst [vmem:[%s137 + $0x4] sm:$0xf] %v213
        %222 = vst [vmem:[%s137 + $0x8] sm:$0xf] %v214
        %223 = vst [vmem:[%s137 + $0xc] sm:$0xf] %v215
        %224 = vst [vmem:[%s137 + $0x10] sm:$0xf] %v216
        %225 = vst [vmem:[%s137 + $0x14] sm:$0xf] %v217
        %226 = vst [vmem:[%s137 + $0x18] sm:$0xf] %v218
        %227 = vst [vmem:[%s137 + $0x1c] sm:$0xf] %v219
        %s228 = sand.u32 %s71, 1
        %s229 = scalar_lea.sflag [#allocation3], %s228
        %s230 = sand.u32 %s71, 1
        %s231 = smul.addr %s230, 32
        %s232 = scalar_lea.vmem [#allocation2], %s231
        // Predicated region
        $region29: #{tpu_custom_call.1} parent=27 // pred_check
          %p233 = pneg %p81
        $region30: #{tpu_custom_call.1} parent=27 // pred_check_branch
          %235 = sbr.rel (%p233) target = $region32
        $region31: #{tpu_custom_call.1} parent=27 // pred_region
          %s236 = smul.u32 8, %s16
          %238 = vsyncadd %s229, 0
          %s239 = smul.addr %s236, 4
          %s240 = scalar_lea.hbm %s2, %s239
          %s241 = sshll.u32 %s232, 4
          %s242 = int_to_ptr.vmem [resolvable:$true] %s241
          %s243 = sshll.u32 %s240, 4
          %s244 = int_to_ptr.hbm [resolvable:$true] %s243
          %249 = dma.vmem_to_hbm [thread:$0]  %s242, 512, %s244, %s229, 64, 64, 4
        $region32: #{tpu_custom_call.1} parent=27 // pred_fallthru
          _
      $region28: #{tpu_custom_call.1} parent=5 // pred_fallthru
        _
      %p250 = scmp.le.s32.totalorder 2, %s11
      // Predicated region
      $region33: #{tpu_custom_call.1} parent=5 // pred_check
        %p251 = pneg %p250
      $region34: #{tpu_custom_call.1} parent=5 // pred_check_branch
        %253 = sbr.rel (%p251) target = $region36
      $region35: #{tpu_custom_call.1} parent=5 // pred_region
        %s254 = ssub.s32 %s11, 2
        // Predicated region
        $region37: #{tpu_custom_call.1} parent=35 // pred_check
          %p255 = pneg %p87
        $region38: #{tpu_custom_call.1} parent=35 // pred_check_branch
          %257 = sbr.rel (%p255) target = $region40
        $region39: #{tpu_custom_call.1} parent=35 // pred_region
          %s258 = sand.u32 %s72, 1
          %s259 = scalar_lea.sflag [#allocation3], %s258
          %s260 = sand.u32 %s72, 1
          %s261 = smul.addr %s260, 32
          %s262 = scalar_lea.vmem [#allocation2], %s261
          %264 = dma.done %s259, 512
        $region40: #{tpu_custom_call.1} parent=35 // pred_fallthru
          _
      $region36: #{tpu_custom_call.1} parent=5 // pred_fallthru
        _
    $region6: #{tpu_custom_call.1} parent=1 // loop_footer
      %s15 = sadd.s32 1, %s11
    $region7: #{tpu_custom_call.1} parent=1 // loop_footer_branch
      %10 = sbr.rel target = $region3
    $region8: #{tpu_custom_call.1} parent=1 // loop_exit
      _
    %265 = vsyncpa [#allocation3], 1
    %s266 = scalar_lea.sflag [#allocation3], 1
    %267 = vsyncpa %s266, 1

// kernel: tpu_custom_call.1
$region0: #{tpu_custom_call.1}
  #allocation0 [shape = 'u32[]', space=smem, size = 0x4, offset = 0x4, fixed_abs, tag = 'smem constant byte address 0x4 - core index']
  #allocation1 [shape = 'u32[72,128]{1,0:T(1,128)}', space=vmem, size = 0x9000, scoped, tag = 'internal scratch']
  %s0 = inlined_call_operand.vmem [shape: f32[256,64], index: 0, kind: input, shape index: {}]
  %s1 = inlined_call_operand.vmem [shape: f32[64,128], index: 1, kind: input, shape index: {}]
  %s2 = inlined_call_operand.hbm [shape: bf16[256,128], index: 2, kind: output, shape index: {}]
  %s3 = sld [smem:[#allocation0]]
  $region41: #{tpu_custom_call.1} parent=0
    _
  %s5 = ssub.s32 1, %s3
  %s6 = scalar_select 0, %s5, %s3
  $region1: #{tpu_custom_call.1} parent=0
    #allocation2 [shape = 'u8[32768]{0}', space=vmem, size = 0x8000, scoped, tag = 'output window, operand 0']
    #allocation3 [shape = 's32[2]{0}', space=sflag, size = 0x8, scoped, tag = 'scoped memory for tpu_custom_call.1']
    %7 = vsyncpa [#allocation3], 0
    %s8 = scalar_lea.sflag [#allocation3], 1
    %9 = vsyncpa %s8, 0
    loop: start=0, step=1, limit=6
    $region2: #{tpu_custom_call.1} parent=1 // loop_pre_header
      _
    $region3: #{tpu_custom_call.1} parent=1 // loop_header
      %s11 = sphi 0, %s15
      %p12 = scmp.ge.s32.totalorder %s11, 6
      %s21 = sphi 0, %s23
      %s24 = sphi 0, %s21
      %s25 = sphi 0, %s24
      %s41 = sphi 0, %s25
      %s45 = sphi 0, %s45
      %s47 = sphi 0, %s45
      %s48 = sphi 0, %s47
      %s62 = sphi 0, %s48
      %s68 = sphi 0, %s70
      %s71 = sphi 0, %s68
      %s72 = sphi 0, %s71
      %s88 = sphi 0, %s72
    $region4: #{tpu_custom_call.1} parent=1 // loop_header_branch
      %14 = sbr.rel (%p12) target = $region8
    $region5: #{tpu_custom_call.1} parent=1 // loop_body
      %s16 = ssub.s32 %s11, 1
      %s17 = ssub.s32 %s11, 2
      %s18 = sadd.s32 %s11, 1
      %s19 = ssub.s32 %s11, %s18
      %p20 = scmp.eq.s32.totalorder %s19, 0
      %s22 = sadd.s32 %s21, 1
      %s23 = scalar_select %p20, %s21, %s22
      %p26 = pneg %p20
      %p27 = scmp.eq.s32.totalorder %s11, 3
      %p28 = por %p26, %p27
      %p29 = scmp.ne.s32.totalorder %s21, %s24
      %p30 = scmp.eq.s32.totalorder %s11, 0
      %p31 = por %p29, %p30
      %p32 = scmp.ne.s32.totalorder %s21, %s24
      %p33 = scmp.eq.s32.totalorder %s16, 3
      %p34 = por %p32, %p33
      %p35 = scmp.ne.s32.totalorder %s24, %s25
      %p36 = scmp.eq.s32.totalorder %s16, 0
      %p37 = por %p35, %p36
      %p38 = scmp.ne.s32.totalorder %s24, %s25
      %p39 = scmp.eq.s32.totalorder %s17, 3
      %p40 = por %p38, %p39
      %p42 = scmp.ne.s32.totalorder %s25, %s41
      %p43 = scmp.eq.s32.totalorder %s17, 0
      %p44 = por %p42, %p43
      %s46 = sadd.s32 %s45, 1
      %p49 = scmp.eq.s32.totalorder %s11, 3
      %p50 = scmp.ne.s32.totalorder %s45, %s47
      %p51 = scmp.eq.s32.totalorder %s11, 0
      %p52 = por %p50, %p51
      %p53 = scmp.ne.s32.totalorder %s45, %s47
      %p54 = scmp.eq.s32.totalorder %s16, 3
      %p55 = por %p53, %p54
      %p56 = scmp.ne.s32.totalorder %s47, %s48
      %p57 = scmp.eq.s32.totalorder %s16, 0
      %p58 = por %p56, %p57
      %p59 = scmp.ne.s32.totalorder %s47, %s48
      %p60 = scmp.eq.s32.totalorder %s17, 3
      %p61 = por %p59, %p60
      %p63 = scmp.ne.s32.totalorder %s48, %s62
      %p64 = scmp.eq.s32.totalorder %s17, 0
      %p65 = por %p63, %p64
      %s66 = ssub.s32 %s11, %s18
      %p67 = scmp.eq.s32.totalorder %s66, 0
      %s69 = sadd.s32 %s68, 1
      %s70 = scalar_select %p67, %s68, %s69
      %p73 = pneg %p67
      %p74 = scmp.eq.s32.totalorder %s11, 3
      %p75 = por %p73, %p74
      %p76 = scmp.ne.s32.totalorder %s68, %s71
      %p77 = scmp.eq.s32.totalorder %s11, 0
      %p78 = por %p76, %p77
      %p79 = scmp.ne.s32.totalorder %s68, %s71
      %p80 = scmp.eq.s32.totalorder %s16, 3
      %p81 = por %p79, %p80
      %p82 = scmp.ne.s32.totalorder %s71, %s72
      %p83 = scmp.eq.s32.totalorder %s16, 0
      %p84 = por %p82, %p83
      %p85 = scmp.ne.s32.totalorder %s71, %s72
      %p86 = scmp.eq.s32.totalorder %s17, 3
      %p87 = por %p85, %p86
      %p89 = scmp.ne.s32.totalorder %s72, %s88
      %p90 = scmp.eq.s32.totalorder %s17, 0
      %p91 = por %p89, %p90
      %p92 = scmp.le.s32.totalorder 1, %s11
      %p93 = scmp.lt.s32.totalorder %s11, 5
      %p94 = pnand %p92, %p93
      %p95 = pneg %p94
      // Predicated region
      $region9: #{tpu_custom_call.1} parent=5 // pred_check
        _
      $region10: #{tpu_custom_call.1} parent=5 // pred_check_branch
        %97 = sbr.rel (%p94) target = $region12
      $region11: #{tpu_custom_call.1} parent=5 // pred_region
        %s98 = ssub.s32 %s11, 1
        // Predicated region
        $region13: #{tpu_custom_call.1} parent=11 // pred_check
          %p99 = pneg %p58
        $region14: #{tpu_custom_call.1} parent=11 // pred_check_branch
          %101 = sbr.rel (%p99) target = $region16
        $region15: #{tpu_custom_call.1} parent=11 // pred_region
          _
        $region16: #{tpu_custom_call.1} parent=11 // pred_fallthru
          _
      $region12: #{tpu_custom_call.1} parent=5 // pred_fallthru
        _
      %p102 = scmp.lt.s32.totalorder %s11, 4
      // Predicated region
      $region17: #{tpu_custom_call.1} parent=5 // pred_check
        %p103 = pneg %p102
      $region18: #{tpu_custom_call.1} parent=5 // pred_check_branch
        %105 = sbr.rel (%p103) target = $region20
      $region19: #{tpu_custom_call.1} parent=5 // pred_region
        // Predicated region
        $region21: #{tpu_custom_call.1} parent=19 // pred_check
          %p106 = pneg %p31
        $region22: #{tpu_custom_call.1} parent=19 // pred_check_branch
          %108 = sbr.rel (%p106) target = $region24
        $region23: #{tpu_custom_call.1} parent=19 // pred_region
          %s109 = smul.u32 8, %s11
          %p110 = scmp.lt.s32.totalorder %s109, 31
          %s111 = scalar_select %p110, %s109, 31
          %s112 = smul.addr %s111, 8
          %s113 = scalar_lea.vmem %s0, %s112
          %s114 = smul.u32 8, %s11
        $region24: #{tpu_custom_call.1} parent=19 // pred_fallthru
          _
      $region20: #{tpu_custom_call.1} parent=5 // pred_fallthru
        _
      %p115 = scmp.le.s32.totalorder 1, %s11
      %p116 = scmp.lt.s32.totalorder %s11, 5
      %p117 = pnand %p115, %p116
      %p118 = pneg %p117
      // Predicated region
      $region25: #{tpu_custom_call.1} parent=5 // pred_check
        _
      $region26: #{tpu_custom_call.1} parent=5 // pred_check_branch
        %120 = sbr.rel (%p117) target = $region28
      $region27: #{tpu_custom_call.1} parent=5 // pred_region
        %s121 = ssub.s32 %s11, 1
        %s122 = smul.u32 8, %s16
        %p123 = scmp.lt.s32.totalorder %s122, 31
        %s124 = scalar_select %p123, %s122, 31
        %s125 = smul.addr %s124, 8
        %s126 = scalar_lea.vmem %s0, %s125
        %p127 = pneg %p37
        %p128 = pneg %p34
        %p129 = pneg %p58
        %p130 = pneg %p55
        %p131 = pneg %p84
        %p132 = pneg %p81
        %s133 = sand.u32 %s71, 1
        %s134 = scalar_lea.sflag [#allocation3], %s133
        %s135 = sand.u32 %s71, 1
        %s136 = smul.addr %s135, 32
        %s137 = scalar_lea.vmem [#allocation2], %s136
        %s138 = smul.u32 8, %s16
        %p139 = scmp.lt.s32.totalorder %s138, 31
        %s140 = scalar_select %p139, %s138, 31
        %s141 = smul.addr %s140, 8
        %s142 = scalar_lea.vmem %s0, %s141
        %s143 = smul.u32 8, %s16
        %s144 = smul.u32 8, %s16
        %v146 = vld [vmem:[%s142] sm:$0xff]
        %v147 = vld [vmem:[%s142 + $0x8] sm:$0xff]
        %v148 = vld [vmem:[%s142 + $0x10] sm:$0xff]
        %v149 = vld [vmem:[%s142 + $0x18] sm:$0xff]
        %v150 = vld [vmem:[%s142 + $0x20] sm:$0xff]
        %v151 = vld [vmem:[%s142 + $0x28] sm:$0xff]
        %v152 = vld [vmem:[%s142 + $0x30] sm:$0xff]
        %v153 = vld [vmem:[%s142 + $0x38] sm:$0xff]
        %v154 = vpack.c.bf16 %v147, %v146
        %v155 = vpack.c.bf16 %v149, %v148
        %v156 = vpack.c.bf16 %v151, %v150
        %v157 = vpack.c.bf16 %v153, %v152
        %v158 = vld [vmem:[%s1] sm:$0xff]
        %v159 = vld [vmem:[%s1 + $0x8] sm:$0xff]
        %v160 = vld [vmem:[%s1 + $0x10] sm:$0xff]
        %v161 = vld [vmem:[%s1 + $0x18] sm:$0xff]
        %v162 = vld [vmem:[%s1 + $0x20] sm:$0xff]
        %v163 = vld [vmem:[%s1 + $0x28] sm:$0xff]
        %v164 = vld [vmem:[%s1 + $0x30] sm:$0xff]
        %v165 = vld [vmem:[%s1 + $0x38] sm:$0xff]
        %v166 = vpack.c.bf16 %v159, %v158
        %v167 = vpack.c.bf16 %v161, %v160
        %v168 = vpack.c.bf16 %v163, %v162
        %v169 = vpack.c.bf16 %v165, %v164
        %vm170 = vcmask 523264
        %v172 = vsel %vm170, %v154, 0
        %v175 = vsel %vm170, %v155, 0
        %v178 = vsel %vm170, %v156, 0
        %v181 = vsel %vm170, %v157, 0
        %183 = vmatpush.bf16.msra.mxu0 0
        %184 = vmatpush.bf16.msra.mxu0 0
        %185 = vmatpush.bf16.msra.mxu0 0
        %186 = vmatpush.bf16.msra.mxu0 0
        %187 = vmatpush.bf16.msra.mxu0 %v169
        %188 = vmatpush.bf16.msra.mxu0 %v168
        %189 = vmatpush.bf16.msra.mxu0 %v167
        %190 = vmatpush.bf16.msra.mxu0 %v166
        %191 = vmatmul.bf16.gmra.mxu0 %v172
        %v192 = vpop.f32.mrf.mxu0
        %v193 = vadd.f32 0.0, %v192
        %v194 = vpop.f32.mrf.mxu0
        %v195 = vadd.f32 0.0, %v194
        %196 = vmatmul.bf16.gmra.mxu0 %v175
        %v197 = vpop.f32.mrf.mxu0
        %v198 = vadd.f32 0.0, %v197
        %v199 = vpop.f32.mrf.mxu0
        %v200 = vadd.f32 0.0, %v199
        %201 = vmatmul.bf16.gmra.mxu0 %v178
        %v202 = vpop.f32.mrf.mxu0
        %v203 = vadd.f32 0.0, %v202
        %v204 = vpop.f32.mrf.mxu0
        %v205 = vadd.f32 0.0, %v204
        %206 = vmatmul.bf16.gmra.mxu0 %v181
        %v207 = vpop.f32.mrf.mxu0
        %v208 = vadd.f32 0.0, %v207
        %v209 = vpop.f32.mrf.mxu0
        %v210 = vadd.f32 0.0, %v209
        %211 = vdwg.mxu0
        %v212 = vpack.c.bf16 %v193, %v193
        %v213 = vpack.c.bf16 %v195, %v195
        %v214 = vpack.c.bf16 %v198, %v198
        %v215 = vpack.c.bf16 %v200, %v200
        %v216 = vpack.c.bf16 %v203, %v203
        %v217 = vpack.c.bf16 %v205, %v205
        %v218 = vpack.c.bf16 %v208, %v208
        %v219 = vpack.c.bf16 %v210, %v210
        %220 = vst [vmem:[%s137] sm:$0xf] %v212
        %221 = vst [vmem:[%s137 + $0x4] sm:$0xf] %v213
        %222 = vst [vmem:[%s137 + $0x8] sm:$0xf] %v214
        %223 = vst [vmem:[%s137 + $0xc] sm:$0xf] %v215
        %224 = vst [vmem:[%s137 + $0x10] sm:$0xf] %v216
        %225 = vst [vmem:[%s137 + $0x14] sm:$0xf] %v217
        %226 = vst [vmem:[%s137 + $0x18] sm:$0xf] %v218
        %227 = vst [vmem:[%s137 + $0x1c] sm:$0xf] %v219
        %s228 = sand.u32 %s71, 1
        %s229 = scalar_lea.sflag [#allocation3], %s228
        %s230 = sand.u32 %s71, 1
        %s231 = smul.addr %s230, 32
        %s232 = scalar_lea.vmem [#allocation2], %s231
        // Predicated region
        $region29: #{tpu_custom_call.1} parent=27 // pred_check
          %p233 = pneg %p81
        $region30: #{tpu_custom_call.1} parent=27 // pred_check_branch
          %235 = sbr.rel (%p233) target = $region32
        $region31: #{tpu_custom_call.1} parent=27 // pred_region
          %s236 = smul.u32 8, %s16
          %238 = vsyncadd %s229, 0
          %s239 = smul.addr %s236, 4
          %s240 = scalar_lea.hbm %s2, %s239
          %s241 = sshll.u32 %s232, 4
          %s242 = int_to_ptr.vmem [resolvable:$true] %s241
          %s243 = sshll.u32 %s240, 4
          %s244 = int_to_ptr.hbm [resolvable:$true] %s243
          %249 = dma.vmem_to_hbm [thread:$0]  %s242, 512, %s244, %s229, 64, 64, 4
        $region32: #{tpu_custom_call.1} parent=27 // pred_fallthru
          _
      $region28: #{tpu_custom_call.1} parent=5 // pred_fallthru
        _
      %p250 = scmp.le.s32.totalorder 2, %s11
      // Predicated region
      $region33: #{tpu_custom_call.1} parent=5 // pred_check
        %p251 = pneg %p250
      $region34: #{tpu_custom_call.1} parent=5 // pred_check_branch
        %253 = sbr.rel (%p251) target = $region36
      $region35: #{tpu_custom_call.1} parent=5 // pred_region
        %s254 = ssub.s32 %s11, 2
        // Predicated region
        $region37: #{tpu_custom_call.1} parent=35 // pred_check
          %p255 = pneg %p87
        $region38: #{tpu_custom_call.1} parent=35 // pred_check_branch
          %257 = sbr.rel (%p255) target = $region40
        $region39: #{tpu_custom_call.1} parent=35 // pred_region
          %s258 = sand.u32 %s72, 1
          %s259 = scalar_lea.sflag [#allocation3], %s258
          %s260 = sand.u32 %s72, 1
          %s261 = smul.addr %s260, 32
          %s262 = scalar_lea.vmem [#allocation2], %s261
          %264 = dma.done %s259, 512
        $region40: #{tpu_custom_call.1} parent=35 // pred_fallthru
          _
      $region36: #{tpu_custom_call.1} parent=5 // pred_fallthru
        _
    $region6: #{tpu_custom_call.1} parent=1 // loop_footer
      %s15 = sadd.s32 1, %s11
    $region7: #{tpu_custom_call.1} parent=1 // loop_footer_branch
      %10 = sbr.rel target = $region3
    $region8: #{tpu_custom_call.1} parent=1 // loop_exit
      _
    %265 = vsyncpa [#allocation3], 1
    %s266 = scalar_lea.sflag [#allocation3], 1
    %267 = vsyncpa %s266, 1

</llo_original>
